<compile_context>
chip_gen: v6e
topology: v6e:2x2x1
jax: 0.10.0
libtpu: 0.0.40
codegen_flags: <defaults>
</compile_context>

<pallas_src>
import functools

import jax
import jax.numpy as jnp
from jax.experimental import pallas as pl
from jax.experimental.pallas import tpu as pltpu


# --------------------------------------------------------------------------
# Kernel
# --------------------------------------------------------------------------
def _extract_fc_kernel(x_ref, w1_ref, b1_ref, w2_ref, b2_ref, o_ref):
    """One branch (all residual blocks) for one batch tile.

    Shapes seen by the kernel (branch dim squeezed by BlockSpec):
      x_ref  : (block_b, D)
      w1_ref : (num_blocks, D, H)    b1_ref : (num_blocks, H)  f32
      w2_ref : (num_blocks, H, D)    b2_ref : (num_blocks, D)  f32
      o_ref  : (block_b, D)
    """
    num_blocks = w1_ref.shape[0]
    w_dtype = w1_ref.dtype

    # Biases are tiny: load once, already f32.
    b1 = b1_ref[...]
    b2 = b2_ref[...]

    # Residual accumulator carried as a loop value (f32); written out once.
    acc = x_ref[...].astype(jnp.float32)

    # num_blocks is small and static -> unrolled Python loop (LLO visibility).
    for blk in range(num_blocks):
        xin = acc if w_dtype == jnp.float32 else acc.astype(w_dtype)
        h = jnp.dot(xin, w1_ref[blk], preferred_element_type=jnp.float32)
        h = jnp.maximum(h + b1[blk:blk + 1, :], 0.0)

        hin = h if w_dtype == jnp.float32 else h.astype(w_dtype)
        y = jnp.dot(hin, w2_ref[blk], preferred_element_type=jnp.float32)
        y = jnp.maximum(y + b2[blk:blk + 1, :], 0.0)

        acc = y + acc                      # residual add in f32

    o_ref[...] = acc.astype(o_ref.dtype)


# --------------------------------------------------------------------------
# Wrapper
# --------------------------------------------------------------------------
def _pick_block_b(B):
    """MXU/roofline-friendly batch tiles; sublane multiple for tiny batches."""
    for cand in (512, 256, 128):
        if B >= cand:
            return cand
    return max(8, ((B + 7) // 8) * 8)


def extract_fc_fused(x, w1s, b1s, w2s, b2s, *, block_b=None,
                     vmem_limit_bytes=None, single_buffer_weights=False):
    """Run all branches / all residual blocks in a single pallas_call.

    x   : (B, D)
    w1s : (n_branch, num_blocks, D, H)   b1s : (n_branch, num_blocks, H)
    w2s : (n_branch, num_blocks, H, D)   b2s : (n_branch, num_blocks, D)
    returns (n_branch, B, D)
    """
    B, D = x.shape
    n_branch, num_blocks, Dw, H = w1s.shape
    assert Dw == D

    # Biases: flatten any stray singleton dim and ship as f32 (avoids per-row
    # sublane padding and per-iteration casts in the kernel).
    b1s = b1s.reshape(n_branch, num_blocks, H).astype(jnp.float32)
    b2s = b2s.reshape(n_branch, num_blocks, D).astype(jnp.float32)

    if block_b is None:
        block_b = _pick_block_b(B)
    B_pad = pl.cdiv(B, block_b) * block_b
    x_in = x if B_pad == B else jnp.zeros((B_pad, D), x.dtype).at[:B].set(x)

    grid = (n_branch, B_pad // block_b)

    # VMEM budget: per-branch weight stack (pipeline-buffered), x/out tiles
    # (double buffered), plus headroom for the (block_b, H) live intermediate.
    w_item = jnp.dtype(w1s.dtype).itemsize
    x_item = jnp.dtype(x.dtype).itemsize
    weight_bytes = num_blocks * 2 * D * H * w_item
    bias_bytes = num_blocks * (H + D) * 4
    tile_bytes = block_b * D * x_item
    w_bufs = 1 if single_buffer_weights else 2
    if vmem_limit_bytes is None:
        need = (w_bufs * (weight_bytes + bias_bytes) + 4 * tile_bytes
                + 2 * block_b * H * 4 + (4 << 20))
        vmem_limit_bytes = int(min(max(need, 32 << 20), 64 << 20))

    # Megacore split: with 2 branches, pin it to the branch axis so each core
    # holds a single branch's weights; with 1 branch, split the batch tiles.
    if n_branch >= 2:
        dims = ("parallel", "arbitrary")
    else:
        dims = ("arbitrary", "parallel")

    # Weight BlockSpecs change block index only when the branch changes, so
    # they are fetched once per branch and stay resident across batch tiles.
    w_kwargs = dict(pipeline_mode=pl.Buffered(1)) if single_buffer_weights else {}

    flops = 4 * n_branch * num_blocks * B_pad * D * H
    bytes_accessed = (x_in.size * x_item + n_branch * B_pad * D * x_item
                      + (w1s.size + w2s.size) * w_item
                      + (b1s.size + b2s.size) * 4)
    cost = pl.CostEstimate(flops=int(flops), transcendentals=0,
                           bytes_accessed=int(bytes_accessed))

    out = pl.pallas_call(
        _extract_fc_kernel,
        out_shape=jax.ShapeDtypeStruct((n_branch, B_pad, D), x.dtype),
        grid_spec=pltpu.PrefetchScalarGridSpec(
            num_scalar_prefetch=0,
            grid=grid,
            in_specs=[
                # x tile (shared by both branches)
                pl.BlockSpec((block_b, D), lambda br, i: (i, 0)),
                # per-branch stacked weights/biases; index_map constant in i.
                pl.BlockSpec((None, num_blocks, D, H),
                             lambda br, i: (br, 0, 0, 0), **w_kwargs),
                pl.BlockSpec((None, num_blocks, H),
                             lambda br, i: (br, 0, 0), **w_kwargs),
                pl.BlockSpec((None, num_blocks, H, D),
                             lambda br, i: (br, 0, 0, 0), **w_kwargs),
                pl.BlockSpec((None, num_blocks, D),
                             lambda br, i: (br, 0, 0), **w_kwargs),
            ],
            out_specs=pl.BlockSpec((None, block_b, D), lambda br, i: (br, i, 0)),
        ),
        compiler_params=pltpu.CompilerParams(
            dimension_semantics=dims,
            vmem_limit_bytes=vmem_limit_bytes,
        ),
        cost_estimate=cost,
    )(x_in, w1s, b1s, w2s, b2s)

    if B_pad != B:
        out = out[:, :B, :]
    return out


# --------------------------------------------------------------------------
# Params / forward / reference
# --------------------------------------------------------------------------
def init_extract_fc_params(key, input_dim, hidden_dim, num_blocks,
                           n_branch=2, dtype=jnp.float32):
    """nn.Linear-style init U(-1/sqrt(in), 1/sqrt(in)), stacked per branch/block.

    Weights are stored as [in_dim, out_dim] (transpose of torch's [out, in]);
    biases are stored in f32 (kernel does all elementwise math in f32).
    """
    def linear(k, in_dim, out_dim):
        kw, kb = jax.random.split(k)
        bound = 1.0 / (in_dim ** 0.5)
        w = jax.random.uniform(kw, (in_dim, out_dim), jnp.float32, -bound, bound)
        b = jax.random.uniform(kb, (out_dim,), jnp.float32, -bound, bound)
        return w.astype(dtype), b.astype(jnp.float32)

    keys = jax.random.split(key, n_branch * num_blocks * 2).reshape(
        n_branch, num_blocks, 2, -1)
    w1, b1, w2, b2 = [], [], [], []
    for br in range(n_branch):
        w1b, b1b, w2b, b2b = [], [], [], []
        for bl in range(num_blocks):
            w, b = linear(keys[br, bl, 0], input_dim, hidden_dim)
            w1b.append(w); b1b.append(b)
            w, b = linear(keys[br, bl, 1], hidden_dim, input_dim)
            w2b.append(w); b2b.append(b)
        w1.append(jnp.stack(w1b)); b1.append(jnp.stack(b1b))
        w2.append(jnp.stack(w2b)); b2.append(jnp.stack(b2b))
    return dict(w1=jnp.stack(w1), b1=jnp.stack(b1),
                w2=jnp.stack(w2), b2=jnp.stack(b2))


@functools.partial(jax.jit, static_argnames=("disable_latent", "block_b"))
def extract_fc_forward(params, x, disable_latent=False, block_b=None):
    """Forward pass of ExtractFC -> (atomic_action_feature, latent_feature)."""
    if disable_latent:
        out = extract_fc_fused(x,
                               params["w1"][:1], params["b1"][:1],
                               params["w2"][:1], params["b2"][:1],
                               block_b=block_b)
        return out[0], jnp.zeros_like(x)
    out = extract_fc_fused(x, params["w1"], params["b1"],
                           params["w2"], params["b2"], block_b=block_b)
    return out[0], out[1]


def _reference_forward(params, x, disable_latent=False):
    """Pure-JAX reference mirroring the kernel's dtype handling."""
    w1, b1, w2, b2 = params["w1"], params["b1"], params["w2"], params["b2"]
    num_blocks = w1.shape[1]
    w_dtype = w1.dtype

    def branch(br, h):
        acc = h.astype(jnp.float32)
        for bl in range(num_blocks):
            xin = acc if w_dtype == jnp.float32 else acc.astype(w_dtype)
            a = jnp.maximum(jnp.dot(xin, w1[br, bl],
                                    preferred_element_type=jnp.float32)
                            + b1[br, bl].astype(jnp.float32), 0.0)
            hin = a if w_dtype == jnp.float32 else a.astype(w_dtype)
            b = jnp.maximum(jnp.dot(hin, w2[br, bl],
                                    preferred_element_type=jnp.float32)
                            + b2[br, bl].astype(jnp.float32), 0.0)
            acc = b + acc
        return acc.astype(x.dtype)

    atomic = branch(0, x)
    latent = jnp.zeros_like(x) if disable_latent else branch(1, x)
    return atomic, latent


# --------------------------------------------------------------------------
# Self-test
# --------------------------------------------------------------------------
if __name__ == "__main__":
    # Small shapes consistent with the module (ExtractFC defaults scaled down).
    batch = 8
    input_dim = 128
    hidden_dim = 256
    num_blocks = 2

    key = jax.random.PRNGKey(0)
    kx, kp = jax.random.split(key)
    x = jax.random.normal(kx, (batch, input_dim), dtype=jnp.float32)
    params = init_extract_fc_params(kp, input_dim, hidden_dim, num_blocks)

    # f32 weights, tight tolerance.
    atomic_feat, latent_feat = extract_fc_forward(params, x, disable_latent=False)
    atomic_feat = jax.block_until_ready(atomic_feat)
    latent_feat = jax.block_until_ready(latent_feat)
    ref_atomic, ref_latent = _reference_forward(params, x, disable_latent=False)
    assert atomic_feat.shape == (batch, input_dim)
    assert latent_feat.shape == (batch, input_dim)
    assert jnp.allclose(atomic_feat, ref_atomic, atol=1e-4, rtol=1e-4)
    assert jnp.allclose(latent_feat, ref_latent, atol=1e-4, rtol=1e-4)

    # disable_latent path (latent branch replaced by zeros, like torch).
    a2, l2 = extract_fc_forward(params, x, disable_latent=True)
    a2 = jax.block_until_ready(a2)
    r2a, _ = _reference_forward(params, x, disable_latent=True)
    assert jnp.allclose(a2, r2a, atol=1e-4, rtol=1e-4)
    assert jnp.allclose(l2, jnp.zeros_like(x))

    # Ragged batch (exercises cdiv + zero padding + output slice).
    x_rag = jax.random.normal(kx, (10, input_dim), dtype=jnp.float32)
    a3, l3 = extract_fc_forward(params, x_rag, disable_latent=False)
    a3 = jax.block_until_ready(a3)
    r3a, r3l = _reference_forward(params, x_rag, disable_latent=False)
    assert a3.shape == (10, input_dim) and l3.shape == (10, input_dim)
    assert jnp.allclose(a3, r3a, atol=1e-4, rtol=1e-4)
    assert jnp.allclose(l3, r3l, atol=1e-4, rtol=1e-4)

    # bf16 weights (v6e/v7x production dtype): MXU-rate path, f32 accumulation.
    params_bf16 = init_extract_fc_params(kp, input_dim, hidden_dim, num_blocks,
                                         dtype=jnp.bfloat16)
    a4, l4 = extract_fc_forward(params_bf16, x, disable_latent=False)
    a4 = jax.block_until_ready(a4)
    r4a, r4l = _reference_forward(params_bf16, x, disable_latent=False)
    assert jnp.allclose(a4, r4a, atol=5e-2, rtol=5e-2)
    assert jnp.allclose(l4, r4l, atol=5e-2, rtol=5e-2)

    print("KERNEL_OK")
</pallas_src>

<mosaic_0001>
module attributes {stable_mosaic.version = 11 : i64} {
  func.func @_extract_fc_kernel(%arg0: i32, %arg1: i32, %arg2: memref<8x128xf32, #tpu.memory_space<vmem>>, %arg3: memref<1x2x128x256xf32, #tpu.memory_space<vmem>>, %arg4: memref<1x2x256xf32, #tpu.memory_space<vmem>>, %arg5: memref<1x2x256x128xf32, #tpu.memory_space<vmem>>, %arg6: memref<1x2x128xf32, #tpu.memory_space<vmem>>, %arg7: memref<1x8x128xf32, #tpu.memory_space<vmem>>) attributes {dimension_semantics = [#tpu.dimension_semantics<parallel>, #tpu.dimension_semantics<arbitrary>], iteration_bounds = array<i64: 2, 1>, scalar_prefetch = 0 : i64, scratch_operands = 0 : i64, tpu.core_type = #tpu.core_type<tc>, window_params = [{transform_indices = @transform_0, window_bounds = array<i64: 8, 128>}, {transform_indices = @transform_1, window_bounds = array<i64: 1, 2, 128, 256>}, {transform_indices = @transform_2, window_bounds = array<i64: 1, 2, 256>}, {transform_indices = @transform_3, window_bounds = array<i64: 1, 2, 256, 128>}, {transform_indices = @transform_4, window_bounds = array<i64: 1, 2, 128>}, {transform_indices = @transform_5, window_bounds = array<i64: 1, 8, 128>}]} {
    %c0 = arith.constant 0 : index
    %c0_0 = arith.constant 0 : index
    %c0_1 = arith.constant 0 : index
    %0 = vector.load %arg4[%c0, %c0_0, %c0_1] : memref<1x2x256xf32, #tpu.memory_space<vmem>>, vector<1x2x256xf32>
    %1 = vector.shape_cast %0 : vector<1x2x256xf32> to vector<2x256xf32>
    %c0_2 = arith.constant 0 : index
    %c0_3 = arith.constant 0 : index
    %c0_4 = arith.constant 0 : index
    %2 = vector.load %arg6[%c0_2, %c0_3, %c0_4] : memref<1x2x128xf32, #tpu.memory_space<vmem>>, vector<1x2x128xf32>
    %3 = vector.shape_cast %2 : vector<1x2x128xf32> to vector<2x128xf32>
    %c0_5 = arith.constant 0 : index
    %c0_6 = arith.constant 0 : index
    %4 = vector.load %arg2[%c0_5, %c0_6] : memref<8x128xf32, #tpu.memory_space<vmem>>, vector<8x128xf32>
    %c0_7 = arith.constant 0 : index
    %c0_8 = arith.constant 0 : index
    %c0_9 = arith.constant 0 : index
    %c0_10 = arith.constant 0 : index
    %5 = vector.load %arg3[%c0_7, %c0_8, %c0_9, %c0_10] : memref<1x2x128x256xf32, #tpu.memory_space<vmem>>, vector<1x1x128x256xf32>
    %6 = vector.shape_cast %5 : vector<1x1x128x256xf32> to vector<128x256xf32>
    %cst = arith.constant dense<0.000000e+00> : vector<8x256xf32>
    %7 = tpu.matmul %4, %6, %cst {dimension_numbers = #tpu.dot_dimension_numbers<[1], [0], [0], [1], [0, 0, 1, 1], [], []>} : vector<8x128xf32>, vector<128x256xf32>, vector<8x256xf32> -> vector<8x256xf32>
    %8 = vector.extract_strided_slice %1 {offsets = [0, 0], sizes = [1, 256], strides = [1, 1]} : vector<2x256xf32> to vector<1x256xf32>
    %9 = vector.broadcast %8 : vector<1x256xf32> to vector<8x256xf32>
    %10 = arith.addf %7, %9 : vector<8x256xf32>
    %cst_11 = arith.constant 0.000000e+00 : f32
    %11 = vector.broadcast %cst_11 : f32 to vector<8x256xf32>
    %12 = arith.maximumf %10, %11 : vector<8x256xf32>
    %c0_12 = arith.constant 0 : index
    %c0_13 = arith.constant 0 : index
    %c0_14 = arith.constant 0 : index
    %c0_15 = arith.constant 0 : index
    %13 = vector.load %arg5[%c0_12, %c0_13, %c0_14, %c0_15] : memref<1x2x256x128xf32, #tpu.memory_space<vmem>>, vector<1x1x256x128xf32>
    %14 = vector.shape_cast %13 : vector<1x1x256x128xf32> to vector<256x128xf32>
    %cst_16 = arith.constant dense<0.000000e+00> : vector<8x128xf32>
    %15 = tpu.matmul %12, %14, %cst_16 {dimension_numbers = #tpu.dot_dimension_numbers<[1], [0], [0], [1], [0, 0, 1, 1], [], []>} : vector<8x256xf32>, vector<256x128xf32>, vector<8x128xf32> -> vector<8x128xf32>
    %16 = vector.extract_strided_slice %3 {offsets = [0, 0], sizes = [1, 128], strides = [1, 1]} : vector<2x128xf32> to vector<1x128xf32>
    %17 = vector.broadcast %16 : vector<1x128xf32> to vector<8x128xf32>
    %18 = arith.addf %15, %17 : vector<8x128xf32>
    %cst_17 = arith.constant 0.000000e+00 : f32
    %19 = vector.broadcast %cst_17 : f32 to vector<8x128xf32>
    %20 = arith.maximumf %18, %19 : vector<8x128xf32>
    %21 = arith.addf %20, %4 : vector<8x128xf32>
    %c0_18 = arith.constant 0 : index
    %c1 = arith.constant 1 : index
    %c0_19 = arith.constant 0 : index
    %c0_20 = arith.constant 0 : index
    %22 = vector.load %arg3[%c0_18, %c1, %c0_19, %c0_20] : memref<1x2x128x256xf32, #tpu.memory_space<vmem>>, vector<1x1x128x256xf32>
    %23 = vector.shape_cast %22 : vector<1x1x128x256xf32> to vector<128x256xf32>
    %cst_21 = arith.constant dense<0.000000e+00> : vector<8x256xf32>
    %24 = tpu.matmul %21, %23, %cst_21 {dimension_numbers = #tpu.dot_dimension_numbers<[1], [0], [0], [1], [0, 0, 1, 1], [], []>} : vector<8x128xf32>, vector<128x256xf32>, vector<8x256xf32> -> vector<8x256xf32>
    %25 = vector.extract_strided_slice %1 {offsets = [1, 0], sizes = [1, 256], strides = [1, 1]} : vector<2x256xf32> to vector<1x256xf32>
    %26 = vector.broadcast %25 : vector<1x256xf32> to vector<8x256xf32>
    %27 = arith.addf %24, %26 : vector<8x256xf32>
    %cst_22 = arith.constant 0.000000e+00 : f32
    %28 = vector.broadcast %cst_22 : f32 to vector<8x256xf32>
    %29 = arith.maximumf %27, %28 : vector<8x256xf32>
    %c0_23 = arith.constant 0 : index
    %c1_24 = arith.constant 1 : index
    %c0_25 = arith.constant 0 : index
    %c0_26 = arith.constant 0 : index
    %30 = vector.load %arg5[%c0_23, %c1_24, %c0_25, %c0_26] : memref<1x2x256x128xf32, #tpu.memory_space<vmem>>, vector<1x1x256x128xf32>
    %31 = vector.shape_cast %30 : vector<1x1x256x128xf32> to vector<256x128xf32>
    %cst_27 = arith.constant dense<0.000000e+00> : vector<8x128xf32>
    %32 = tpu.matmul %29, %31, %cst_27 {dimension_numbers = #tpu.dot_dimension_numbers<[1], [0], [0], [1], [0, 0, 1, 1], [], []>} : vector<8x256xf32>, vector<256x128xf32>, vector<8x128xf32> -> vector<8x128xf32>
    %33 = vector.extract_strided_slice %3 {offsets = [1, 0], sizes = [1, 128], strides = [1, 1]} : vector<2x128xf32> to vector<1x128xf32>
    %34 = vector.broadcast %33 : vector<1x128xf32> to vector<8x128xf32>
    %35 = arith.addf %32, %34 : vector<8x128xf32>
    %cst_28 = arith.constant 0.000000e+00 : f32
    %36 = vector.broadcast %cst_28 : f32 to vector<8x128xf32>
    %37 = arith.maximumf %35, %36 : vector<8x128xf32>
    %38 = arith.addf %37, %21 : vector<8x128xf32>
    %c0_29 = arith.constant 0 : index
    %c0_30 = arith.constant 0 : index
    %c0_31 = arith.constant 0 : index
    %39 = vector.load %arg7[%c0_29, %c0_30, %c0_31] : memref<1x8x128xf32, #tpu.memory_space<vmem>>, vector<1x8x128xf32>
    %40 = vector.shape_cast %39 : vector<1x8x128xf32> to vector<8x128xf32>
    %41 = vector.shape_cast %38 : vector<8x128xf32> to vector<1x8x128xf32>
    tpu.vector_store %arg7[%c0_29, %c0_30, %c0_31], %41 {strides = array<i32>} : memref<1x8x128xf32, #tpu.memory_space<vmem>>, vector<1x8x128xf32>,
    return
  }
  func.func @transform_0(%arg0: i32, %arg1: i32) -> (i32, i32) {
    %c0_i32 = arith.constant 0 : i32
    %c0_i32_0 = arith.constant 0 : i32
    return %arg1, %c0_i32 : i32, i32
  }
  func.func @transform_1(%arg0: i32, %arg1: i32) -> (i32, i32, i32, i32) {
    %c0_i32 = arith.constant 0 : i32
    %c0_i32_0 = arith.constant 0 : i32
    %c0_i32_1 = arith.constant 0 : i32
    %c0_i32_2 = arith.constant 0 : i32
    return %arg0, %c0_i32, %c0_i32_0, %c0_i32_1 : i32, i32, i32, i32
  }
  func.func @transform_2(%arg0: i32, %arg1: i32) -> (i32, i32, i32) {
    %c0_i32 = arith.constant 0 : i32
    %c0_i32_0 = arith.constant 0 : i32
    %c0_i32_1 = arith.constant 0 : i32
    return %arg0, %c0_i32, %c0_i32_0 : i32, i32, i32
  }
  func.func @transform_3(%arg0: i32, %arg1: i32) -> (i32, i32, i32, i32) {
    %c0_i32 = arith.constant 0 : i32
    %c0_i32_0 = arith.constant 0 : i32
    %c0_i32_1 = arith.constant 0 : i32
    %c0_i32_2 = arith.constant 0 : i32
    return %arg0, %c0_i32, %c0_i32_0, %c0_i32_1 : i32, i32, i32, i32
  }
  func.func @transform_4(%arg0: i32, %arg1: i32) -> (i32, i32, i32) {
    %c0_i32 = arith.constant 0 : i32
    %c0_i32_0 = arith.constant 0 : i32
    %c0_i32_1 = arith.constant 0 : i32
    return %arg0, %c0_i32, %c0_i32_0 : i32, i32, i32
  }
  func.func @transform_5(%arg0: i32, %arg1: i32) -> (i32, i32, i32) {
    %c0_i32 = arith.constant 0 : i32
    %c0_i32_0 = arith.constant 0 : i32
    return %arg0, %arg1, %c0_i32 : i32, i32, i32
  }
}

</mosaic_0001>

<llo_original>
// kernel: extract_fc_forward.1
$region0: #{extract_fc_forward.1}
  #allocation0 [shape = 'u32[]', space=smem, size = 0x4, offset = 0x4, fixed_abs, tag = 'smem constant byte address 0x4 - core index']
  #allocation1 [shape = 'u32[144,128]{1,0:T(1,128)}', space=vmem, size = 0x12000, scoped, tag = 'internal scratch']
  %s0 = inlined_call_operand.hbm [shape: f32[8,128], index: 0, kind: input, shape index: {}]
  %s1 = inlined_call_operand.hbm [shape: f32[2,2,128,256], index: 1, kind: input, shape index: {}]
  %s2 = inlined_call_operand.hbm [shape: f32[2,2,256], index: 2, kind: input, shape index: {}]
  %s3 = inlined_call_operand.hbm [shape: f32[2,2,256,128], index: 3, kind: input, shape index: {}]
  %s4 = inlined_call_operand.hbm [shape: f32[2,2,128], index: 4, kind: input, shape index: {}]
  %s5 = inlined_call_operand.vmem [shape: f32[2,8,128], index: 5, kind: output, shape index: {}]
  %s6 = sld [smem:[#allocation0]]
  $region73: #{extract_fc_forward.1} parent=0
    _
  %s8 = ssub.s32 1, %s6
  %s9 = scalar_select 0, %s8, %s6
  $region1: #{extract_fc_forward.1} parent=0
    #allocation2 [shape = 'u8[4096]{0}', space=vmem, size = 0x1000, scoped, tag = 'input window, operand 0, single buffered']
    #allocation3 [shape = 's32[2]{0}', space=sflag, size = 0x8, scoped, tag = 'scoped memory for extract_fc_forward.1']
    #allocation4 [shape = 'u8[524288]{0}', space=vmem, size = 0x80000, scoped, tag = 'input window, operand 1']
    #allocation5 [shape = 's32[2]{0}', space=sflag, size = 0x8, scoped, tag = 'scoped memory for extract_fc_forward.1']
    #allocation6 [shape = 'u8[4096]{0}', space=vmem, size = 0x1000, scoped, tag = 'input window, operand 2']
    #allocation7 [shape = 'u8[524288]{0}', space=vmem, size = 0x80000, scoped, tag = 'input window, operand 3']
    #allocation8 [shape = 's32[2]{0}', space=sflag, size = 0x8, scoped, tag = 'scoped memory for extract_fc_forward.1']
    #allocation9 [shape = 'u8[2048]{0}', space=vmem, size = 0x800, scoped, tag = 'input window, operand 4']
    %10 = vsyncpa [#allocation3], 0
    %11 = vsyncpa [#allocation5], 0
    %s12 = scalar_lea.sflag [#allocation5], 1
    %13 = vsyncpa %s12, 0
    %14 = vsyncpa [#allocation8], 0
    %s15 = scalar_lea.sflag [#allocation8], 1
    %16 = vsyncpa %s15, 0
    loop: start=0, step=1, limit=4
    $region2: #{extract_fc_forward.1} parent=1 // loop_pre_header
      _
    $region3: #{extract_fc_forward.1} parent=1 // loop_header
      %s18 = sphi 0, %s22
      %p19 = scmp.ge.s32.totalorder %s18, 4
      %s25 = sphi 0, %s37
      %s26 = sphi 0, %s33
      %s27 = sphi 0, %s25
      %s28 = sphi 0, %s26
      %s29 = sphi 0, %s27
      %s30 = sphi 0, %s28
      %s40 = sphi 0, %s42
      %s43 = sphi 0, %s40
      %s44 = sphi 0, %s43
      %s60 = sphi 0, %s44
      %s66 = sphi 0, %s68
      %s69 = sphi 0, %s66
      %s70 = sphi 0, %s69
      %s86 = sphi 0, %s70
      %s92 = sphi 0, %s94
      %s95 = sphi 0, %s92
      %s96 = sphi 0, %s95
      %s112 = sphi 0, %s96
      %s118 = sphi 0, %s120
      %s121 = sphi 0, %s118
      %s122 = sphi 0, %s121
      %s138 = sphi 0, %s122
      %s144 = sphi 0, %s146
      %s147 = sphi 0, %s144
      %s148 = sphi 0, %s147
      %s164 = sphi 0, %s148
      %s172 = sphi 0, %s174
      %s175 = sphi 0, %s172
      %s176 = sphi 0, %s175
      %s192 = sphi 0, %s176
    $region4: #{extract_fc_forward.1} parent=1 // loop_header_branch
      %21 = sbr.rel (%p19) target = $region8
    $region5: #{extract_fc_forward.1} parent=1 // loop_body
      %s23 = ssub.s32 %s18, 1
      %s24 = ssub.s32 %s18, 2
      %s31 = sadd.s32 1, %s26
      %p32 = scmp.ge.s32.totalorder %s31, 1
      %s33 = scalar_select %p32, 0, %s31
      %s34 = sadd.s32 1, %s25
      %s35 = scalar_select %p32, %s34, %s25
      %p36 = scmp.ge.s32.totalorder %s35, 2
      %s37 = scalar_select %p36, 0, %s35
      %s38 = ssub.s32 %s26, %s33
      %p39 = scmp.eq.s32.totalorder %s38, 0
      %s41 = sadd.s32 %s40, 1
      %s42 = scalar_select %p39, %s40, %s41
      %p45 = pneg %p39
      %p46 = scmp.eq.s32.totalorder %s18, 1
      %p47 = por %p45, %p46
      %p48 = scmp.ne.s32.totalorder %s40, %s43
      %p49 = scmp.eq.s32.totalorder %s18, 0
      %p50 = por %p48, %p49
      %p51 = scmp.ne.s32.totalorder %s40, %s43
      %p52 = scmp.eq.s32.totalorder %s23, 1
      %p53 = por %p51, %p52
      %p54 = scmp.ne.s32.totalorder %s43, %s44
      %p55 = scmp.eq.s32.totalorder %s23, 0
      %p56 = por %p54, %p55
      %p57 = scmp.ne.s32.totalorder %s43, %s44
      %p58 = scmp.eq.s32.totalorder %s24, 1
      %p59 = por %p57, %p58
      %p61 = scmp.ne.s32.totalorder %s44, %s60
      %p62 = scmp.eq.s32.totalorder %s24, 0
      %p63 = por %p61, %p62
      %s64 = ssub.s32 %s25, %s37
      %p65 = scmp.eq.s32.totalorder %s64, 0
      %s67 = sadd.s32 %s66, 1
      %s68 = scalar_select %p65, %s66, %s67
      %p71 = pneg %p65
      %p72 = scmp.eq.s32.totalorder %s18, 1
      %p73 = por %p71, %p72
      %p74 = scmp.ne.s32.totalorder %s66, %s69
      %p75 = scmp.eq.s32.totalorder %s18, 0
      %p76 = por %p74, %p75
      %p77 = scmp.ne.s32.totalorder %s66, %s69
      %p78 = scmp.eq.s32.totalorder %s23, 1
      %p79 = por %p77, %p78
      %p80 = scmp.ne.s32.totalorder %s69, %s70
      %p81 = scmp.eq.s32.totalorder %s23, 0
      %p82 = por %p80, %p81
      %p83 = scmp.ne.s32.totalorder %s69, %s70
      %p84 = scmp.eq.s32.totalorder %s24, 1
      %p85 = por %p83, %p84
      %p87 = scmp.ne.s32.totalorder %s70, %s86
      %p88 = scmp.eq.s32.totalorder %s24, 0
      %p89 = por %p87, %p88
      %s90 = ssub.s32 %s25, %s37
      %p91 = scmp.eq.s32.totalorder %s90, 0
      %s93 = sadd.s32 %s92, 1
      %s94 = scalar_select %p91, %s92, %s93
      %p97 = pneg %p91
      %p98 = scmp.eq.s32.totalorder %s18, 1
      %p99 = por %p97, %p98
      %p100 = scmp.ne.s32.totalorder %s92, %s95
      %p101 = scmp.eq.s32.totalorder %s18, 0
      %p102 = por %p100, %p101
      %p103 = scmp.ne.s32.totalorder %s92, %s95
      %p104 = scmp.eq.s32.totalorder %s23, 1
      %p105 = por %p103, %p104
      %p106 = scmp.ne.s32.totalorder %s95, %s96
      %p107 = scmp.eq.s32.totalorder %s23, 0
      %p108 = por %p106, %p107
      %p109 = scmp.ne.s32.totalorder %s95, %s96
      %p110 = scmp.eq.s32.totalorder %s24, 1
      %p111 = por %p109, %p110
      %p113 = scmp.ne.s32.totalorder %s96, %s112
      %p114 = scmp.eq.s32.totalorder %s24, 0
      %p115 = por %p113, %p114
      %s116 = ssub.s32 %s25, %s37
      %p117 = scmp.eq.s32.totalorder %s116, 0
      %s119 = sadd.s32 %s118, 1
      %s120 = scalar_select %p117, %s118, %s119
      %p123 = pneg %p117
      %p124 = scmp.eq.s32.totalorder %s18, 1
      %p125 = por %p123, %p124
      %p126 = scmp.ne.s32.totalorder %s118, %s121
      %p127 = scmp.eq.s32.totalorder %s18, 0
      %p128 = por %p126, %p127
      %p129 = scmp.ne.s32.totalorder %s118, %s121
      %p130 = scmp.eq.s32.totalorder %s23, 1
      %p131 = por %p129, %p130
      %p132 = scmp.ne.s32.totalorder %s121, %s122
      %p133 = scmp.eq.s32.totalorder %s23, 0
      %p134 = por %p132, %p133
      %p135 = scmp.ne.s32.totalorder %s121, %s122
      %p136 = scmp.eq.s32.totalorder %s24, 1
      %p137 = por %p135, %p136
      %p139 = scmp.ne.s32.totalorder %s122, %s138
      %p140 = scmp.eq.s32.totalorder %s24, 0
      %p141 = por %p139, %p140
      %s142 = ssub.s32 %s25, %s37
      %p143 = scmp.eq.s32.totalorder %s142, 0
      %s145 = sadd.s32 %s144, 1
      %s146 = scalar_select %p143, %s144, %s145
      %p149 = pneg %p143
      %p150 = scmp.eq.s32.totalorder %s18, 1
      %p151 = por %p149, %p150
      %p152 = scmp.ne.s32.totalorder %s144, %s147
      %p153 = scmp.eq.s32.totalorder %s18, 0
      %p154 = por %p152, %p153
      %p155 = scmp.ne.s32.totalorder %s144, %s147
      %p156 = scmp.eq.s32.totalorder %s23, 1
      %p157 = por %p155, %p156
      %p158 = scmp.ne.s32.totalorder %s147, %s148
      %p159 = scmp.eq.s32.totalorder %s23, 0
      %p160 = por %p158, %p159
      %p161 = scmp.ne.s32.totalorder %s147, %s148
      %p162 = scmp.eq.s32.totalorder %s24, 1
      %p163 = por %p161, %p162
      %p165 = scmp.ne.s32.totalorder %s148, %s164
      %p166 = scmp.eq.s32.totalorder %s24, 0
      %p167 = por %p165, %p166
      %s168 = ssub.s32 %s25, %s37
      %s169 = ssub.s32 %s26, %s33
      %s170 = sor.u32 %s168, %s169
      %p171 = scmp.eq.s32.totalorder %s170, 0
      %s173 = sadd.s32 %s172, 1
      %s174 = scalar_select %p171, %s172, %s173
      %p177 = pneg %p171
      %p178 = scmp.eq.s32.totalorder %s18, 1
      %p179 = por %p177, %p178
      %p180 = scmp.ne.s32.totalorder %s172, %s175
      %p181 = scmp.eq.s32.totalorder %s18, 0
      %p182 = por %p180, %p181
      %p183 = scmp.ne.s32.totalorder %s172, %s175
      %p184 = scmp.eq.s32.totalorder %s23, 1
      %p185 = por %p183, %p184
      %p186 = scmp.ne.s32.totalorder %s175, %s176
      %p187 = scmp.eq.s32.totalorder %s23, 0
      %p188 = por %p186, %p187
      %p189 = scmp.ne.s32.totalorder %s175, %s176
      %p190 = scmp.eq.s32.totalorder %s24, 1
      %p191 = por %p189, %p190
      %p193 = scmp.ne.s32.totalorder %s176, %s192
      %p194 = scmp.eq.s32.totalorder %s24, 0
      %p195 = por %p193, %p194
      %p196 = scmp.le.s32.totalorder 1, %s18
      %p197 = scmp.lt.s32.totalorder %s18, 3
      %p198 = pnand %p196, %p197
      %p199 = pneg %p198
      // Predicated region
      $region9: #{extract_fc_forward.1} parent=5 // pred_check
        _
      $region10: #{extract_fc_forward.1} parent=5 // pred_check_branch
        %201 = sbr.rel (%p198) target = $region12
      $region11: #{extract_fc_forward.1} parent=5 // pred_region
        %s202 = ssub.s32 %s18, 1
        // Predicated region
        $region13: #{extract_fc_forward.1} parent=11 // pred_check
          %p203 = pneg %p56
        $region14: #{extract_fc_forward.1} parent=11 // pred_check_branch
          %205 = sbr.rel (%p203) target = $region16
        $region15: #{extract_fc_forward.1} parent=11 // pred_region
          %s207 = ssub.s32 128, 128
          %208 = vsyncadd [#allocation3], %s207
          %s209 = smul.addr %s28, 128
          %s210 = scalar_lea.hbm %s0, %s209
          %s212 = sshll.u32 [#allocation2], 4
          %s213 = int_to_ptr.vmem [resolvable:$true] %s212
          %215 = dma.hbm_to_vmem [thread:$0]  %s210, 128, %s213, [#allocation3]
        $region16: #{extract_fc_forward.1} parent=11 // pred_fallthru
          _
      $region12: #{extract_fc_forward.1} parent=5 // pred_fallthru
        _
      %p216 = scmp.lt.s32.totalorder %s18, 2
      // Predicated region
      $region17: #{extract_fc_forward.1} parent=5 // pred_check
        %p217 = pneg %p216
      $region18: #{extract_fc_forward.1} parent=5 // pred_check_branch
        %219 = sbr.rel (%p217) target = $region20
      $region19: #{extract_fc_forward.1} parent=5 // pred_region
        // Predicated region
        $region21: #{extract_fc_forward.1} parent=19 // pred_check
          %p220 = pneg %p76
        $region22: #{extract_fc_forward.1} parent=19 // pred_check_branch
          %222 = sbr.rel (%p220) target = $region24
        $region23: #{extract_fc_forward.1} parent=19 // pred_region
          %s223 = sand.u32 %s18, 1
          %s224 = scalar_lea.sflag [#allocation5], %s223
          %s225 = sand.u32 %s66, 1
          %s226 = smul.addr %s225, 512
          %s227 = scalar_lea.vmem [#allocation4], %s226
          %s229 = ssub.s32 8192, 8192
          %230 = vsyncadd %s224, %s229
          %s231 = smul.addr %s25, 64
          %s232 = smul.addr %s231, 128
          %s233 = scalar_lea.hbm %s1, %s232
          %s234 = sshll.u32 %s227, 4
          %s235 = int_to_ptr.vmem [resolvable:$true] %s234
          %240 = dma.hbm_to_vmem [thread:$0]  %s233, 8192, %s235, %s224, 256, 256, 16
        $region24: #{extract_fc_forward.1} parent=19 // pred_fallthru
          _
        // Predicated region
        $region25: #{extract_fc_forward.1} parent=19 // pred_check
          %p241 = pneg %p102
        $region26: #{extract_fc_forward.1} parent=19 // pred_check_branch
          %243 = sbr.rel (%p241) target = $region28
        $region27: #{extract_fc_forward.1} parent=19 // pred_region
          %s244 = sand.u32 %s18, 1
          %s245 = scalar_lea.sflag [#allocation5], %s244
          %s246 = sand.u32 %s92, 1
          %s247 = smul.addr %s246, 4
          %s248 = scalar_lea.vmem [#allocation6], %s247
          %s250 = ssub.s32 64, 64
          %251 = vsyncadd %s245, %s250
          %s252 = smul.addr %s25, 2
          %s253 = smul.addr %s252, 32
          %s254 = scalar_lea.hbm %s2, %s253
          %s256 = sshll.u32 %s248, 4
          %s257 = int_to_ptr.vmem [resolvable:$true] %s256
          %259 = dma.hbm_to_vmem [thread:$0]  %s254, 64, %s257, %s245
        $region28: #{extract_fc_forward.1} parent=19 // pred_fallthru
          _
        // Predicated region
        $region29: #{extract_fc_forward.1} parent=19 // pred_check
          %p260 = pneg %p128
        $region30: #{extract_fc_forward.1} parent=19 // pred_check_branch
          %262 = sbr.rel (%p260) target = $region32
        $region31: #{extract_fc_forward.1} parent=19 // pred_region
          %s263 = sand.u32 %s18, 1
          %s264 = scalar_lea.sflag [#allocation8], %s263
          %s265 = sand.u32 %s118, 1
          %s266 = smul.addr %s265, 512
          %s267 = scalar_lea.vmem [#allocation7], %s266
          %s269 = ssub.s32 8192, 8192
          %270 = vsyncadd %s264, %s269
          %s271 = smul.addr %s25, 64
          %s272 = smul.addr %s271, 128
          %s273 = scalar_lea.hbm %s3, %s272
          %s274 = sshll.u32 %s267, 4
          %s275 = int_to_ptr.vmem [resolvable:$true] %s274
          %280 = dma.hbm_to_vmem [thread:$0]  %s273, 8192, %s275, %s264, 128, 128, 8
        $region32: #{extract_fc_forward.1} parent=19 // pred_fallthru
          _
        // Predicated region
        $region33: #{extract_fc_forward.1} parent=19 // pred_check
          %p281 = pneg %p154
        $region34: #{extract_fc_forward.1} parent=19 // pred_check_branch
          %283 = sbr.rel (%p281) target = $region36
        $region35: #{extract_fc_forward.1} parent=19 // pred_region
          %s284 = sand.u32 %s18, 1
          %s285 = scalar_lea.sflag [#allocation8], %s284
          %s286 = sand.u32 %s144, 1
          %s287 = smul.addr %s286, 2
          %s288 = scalar_lea.vmem [#allocation9], %s287
          %s290 = ssub.s32 32, 32
          %291 = vsyncadd %s285, %s290
          %s292 = smul.addr %s25, 32
          %s293 = scalar_lea.hbm %s4, %s292
          %s295 = sshll.u32 %s288, 4
          %s296 = int_to_ptr.vmem [resolvable:$true] %s295
          %298 = dma.hbm_to_vmem [thread:$0]  %s293, 32, %s296, %s285
        $region36: #{extract_fc_forward.1} parent=19 // pred_fallthru
          _
      $region20: #{extract_fc_forward.1} parent=5 // pred_fallthru
        _
      %p299 = scmp.le.s32.totalorder 1, %s18
      %p300 = scmp.lt.s32.totalorder %s18, 3
      %p301 = pnand %p299, %p300
      %p302 = pneg %p301
      // Predicated region
      $region37: #{extract_fc_forward.1} parent=5 // pred_check
        _
      $region38: #{extract_fc_forward.1} parent=5 // pred_check_branch
        %304 = sbr.rel (%p301) target = $region40
      $region39: #{extract_fc_forward.1} parent=5 // pred_region
        %s305 = ssub.s32 %s18, 1
        // Predicated region
        $region41: #{extract_fc_forward.1} parent=39 // pred_check
          %p306 = pneg %p56
        $region42: #{extract_fc_forward.1} parent=39 // pred_check_branch
          %308 = sbr.rel (%p306) target = $region44
        $region43: #{extract_fc_forward.1} parent=39 // pred_region
          %309 = dma.done [#allocation3], 128
        $region44: #{extract_fc_forward.1} parent=39 // pred_fallthru
          _
        %s310 = sand.u32 %s23, 1
        %s311 = scalar_lea.sflag [#allocation5], %s310
        %s312 = sand.u32 %s69, 1
        %s313 = smul.addr %s312, 512
        %s314 = scalar_lea.vmem [#allocation4], %s313
        // Predicated region
        $region45: #{extract_fc_forward.1} parent=39 // pred_check
          %p315 = pneg %p82
        $region46: #{extract_fc_forward.1} parent=39 // pred_check_branch
          %317 = sbr.rel (%p315) target = $region48
        $region47: #{extract_fc_forward.1} parent=39 // pred_region
          %318 = dma.done %s311, 8192
        $region48: #{extract_fc_forward.1} parent=39 // pred_fallthru
          _
        %s319 = sand.u32 %s23, 1
        %s320 = scalar_lea.sflag [#allocation5], %s319
        %s321 = sand.u32 %s95, 1
        %s322 = smul.addr %s321, 4
        %s323 = scalar_lea.vmem [#allocation6], %s322
        // Predicated region
        $region49: #{extract_fc_forward.1} parent=39 // pred_check
          %p324 = pneg %p108
        $region50: #{extract_fc_forward.1} parent=39 // pred_check_branch
          %326 = sbr.rel (%p324) target = $region52
        $region51: #{extract_fc_forward.1} parent=39 // pred_region
          %327 = dma.done %s320, 64
        $region52: #{extract_fc_forward.1} parent=39 // pred_fallthru
          _
        %s328 = sand.u32 %s23, 1
        %s329 = scalar_lea.sflag [#allocation8], %s328
        %s330 = sand.u32 %s121, 1
        %s331 = smul.addr %s330, 512
        %s332 = scalar_lea.vmem [#allocation7], %s331
        // Predicated region
        $region53: #{extract_fc_forward.1} parent=39 // pred_check
          %p333 = pneg %p134
        $region54: #{extract_fc_forward.1} parent=39 // pred_check_branch
          %335 = sbr.rel (%p333) target = $region56
        $region55: #{extract_fc_forward.1} parent=39 // pred_region
          %336 = dma.done %s329, 8192
        $region56: #{extract_fc_forward.1} parent=39 // pred_fallthru
          _
        %s337 = sand.u32 %s23, 1
        %s338 = scalar_lea.sflag [#allocation8], %s337
        %s339 = sand.u32 %s147, 1
        %s340 = smul.addr %s339, 2
        %s341 = scalar_lea.vmem [#allocation9], %s340
        // Predicated region
        $region57: #{extract_fc_forward.1} parent=39 // pred_check
          %p342 = pneg %p160
        $region58: #{extract_fc_forward.1} parent=39 // pred_check_branch
          %344 = sbr.rel (%p342) target = $region60
        $region59: #{extract_fc_forward.1} parent=39 // pred_region
          %345 = dma.done %s338, 32
        $region60: #{extract_fc_forward.1} parent=39 // pred_fallthru
          _
        %p346 = pneg %p56
        %p347 = pneg %p53
        %s348 = sand.u32 %s23, 1
        %s349 = scalar_lea.sflag [#allocation5], %s348
        %s350 = sand.u32 %s69, 1
        %s351 = smul.addr %s350, 512
        %s352 = scalar_lea.vmem [#allocation4], %s351
        %p353 = pneg %p82
        %p354 = pneg %p79
        %s355 = sand.u32 %s23, 1
        %s356 = scalar_lea.sflag [#allocation5], %s355
        %s357 = sand.u32 %s95, 1
        %s358 = smul.addr %s357, 4
        %s359 = scalar_lea.vmem [#allocation6], %s358
        %p360 = pneg %p108
        %p361 = pneg %p105
        %s362 = sand.u32 %s23, 1
        %s363 = scalar_lea.sflag [#allocation8], %s362
        %s364 = sand.u32 %s121, 1
        %s365 = smul.addr %s364, 512
        %s366 = scalar_lea.vmem [#allocation7], %s365
        %p367 = pneg %p134
        %p368 = pneg %p131
        %s369 = sand.u32 %s23, 1
        %s370 = scalar_lea.sflag [#allocation8], %s369
        %s371 = sand.u32 %s147, 1
        %s372 = smul.addr %s371, 2
        %s373 = scalar_lea.vmem [#allocation9], %s372
        %p374 = pneg %p160
        %p375 = pneg %p157
        %p376 = pneg %p188
        %p377 = pneg %p185
        %p378 = scmp.lt.s32.totalorder %s27, 1
        %s379 = scalar_select %p378, %s27, 1
        %p380 = scmp.lt.s32.totalorder %s28, 0
        %s381 = scalar_select %p380, %s28, 0
        %s382 = sadd.s32 %s381, %s379
        %s383 = smul.addr %s382, 8
        %s384 = scalar_lea.vmem %s5, %s383
        %p385 = scmp.lt.s32.totalorder %s27, 1
        %s386 = scalar_select %p385, %s27, 1
        %p387 = scmp.lt.s32.totalorder %s28, 0
        %s388 = scalar_select %p387, %s28, 0
        %s389 = sadd.s32 %s388, %s386
        %s390 = smul.addr %s389, 8
        %s391 = scalar_lea.vmem %s5, %s390
        %v392 = vld [vmem:[%s323] sm:$0xf]
        %v393 = vld [vmem:[%s341] sm:$0x3]
        %v394 = vld [vmem:[#allocation2] sm:$0xff]
        %v395 = vld [vmem:[%s314] sm:$0xff]
        %v396 = vld [vmem:[%s314 + $0x8] sm:$0xff]
        %v397 = vld [vmem:[%s314 + $0x10] sm:$0xff]
        %v398 = vld [vmem:[%s314 + $0x18] sm:$0xff]
        %v399 = vld [vmem:[%s314 + $0x20] sm:$0xff]
        %v400 = vld [vmem:[%s314 + $0x28] sm:$0xff]
        %v401 = vld [vmem:[%s314 + $0x30] sm:$0xff]
        %v402 = vld [vmem:[%s314 + $0x38] sm:$0xff]
        %v403 = vld [vmem:[%s314 + $0x40] sm:$0xff]
        %v404 = vld [vmem:[%s314 + $0x48] sm:$0xff]
        %v405 = vld [vmem:[%s314 + $0x50] sm:$0xff]
        %v406 = vld [vmem:[%s314 + $0x58] sm:$0xff]
        %v407 = vld [vmem:[%s314 + $0x60] sm:$0xff]
        %v408 = vld [vmem:[%s314 + $0x68] sm:$0xff]
        %v409 = vld [vmem:[%s314 + $0x70] sm:$0xff]
        %v410 = vld [vmem:[%s314 + $0x78] sm:$0xff]
        %v411 = vld [vmem:[%s314 + $0x80] sm:$0xff]
        %v412 = vld [vmem:[%s314 + $0x88] sm:$0xff]
        %v413 = vld [vmem:[%s314 + $0x90] sm:$0xff]
        %v414 = vld [vmem:[%s314 + $0x98] sm:$0xff]
        %v415 = vld [vmem:[%s314 + $0xa0] sm:$0xff]
        %v416 = vld [vmem:[%s314 + $0xa8] sm:$0xff]
        %v417 = vld [vmem:[%s314 + $0xb0] sm:$0xff]
        %v418 = vld [vmem:[%s314 + $0xb8] sm:$0xff]
        %v419 = vld [vmem:[%s314 + $0xc0] sm:$0xff]
        %v420 = vld [vmem:[%s314 + $0xc8] sm:$0xff]
        %v421 = vld [vmem:[%s314 + $0xd0] sm:$0xff]
        %v422 = vld [vmem:[%s314 + $0xd8] sm:$0xff]
        %v423 = vld [vmem:[%s314 + $0xe0] sm:$0xff]
        %v424 = vld [vmem:[%s314 + $0xe8] sm:$0xff]
        %v425 = vld [vmem:[%s314 + $0xf0] sm:$0xff]
        %v426 = vld [vmem:[%s314 + $0xf8] sm:$0xff]
        %v428 = vlaneseq
        %v429 = vshrl.u32 %v428, 7
        %v430 = vsub.s32 0, %v429
        %v431 = vrot.slane %v392, %v430
        %v432 = vlaneseq
        %v433 = vshrl.u32 %v432, 7
        %v434 = vsub.s32 2, %v433
        %v435 = vrot.slane %v392, %v434
        %v438 = vlaneseq
        %v439 = vshrl.u32 %v438, 7
        %v440 = vsub.s32 0, %v439
        %v441 = vrot.slane %v431, %v440
        %v442 = vlaneseq
        %v443 = vshrl.u32 %v442, 7
        %v444 = vsub.s32 0, %v443
        %v445 = vrot.slane %v435, %v444
        %446 = vmatprep.subr.mxu0 %v426
        %447 = vmatpush1.msra.mxu0 %v425
        %448 = vmatprep.subr.mxu0 %v424
        %449 = vmatpush1.msra.mxu0 %v423
        %450 = vmatprep.subr.mxu0 %v422
        %451 = vmatpush1.msra.mxu0 %v421
        %452 = vmatprep.subr.mxu0 %v420
        %453 = vmatpush1.msra.mxu0 %v419
        %454 = vmatprep.subr.mxu0 %v418
        %455 = vmatpush1.msra.mxu0 %v417
        %456 = vmatprep.subr.mxu0 %v416
        %457 = vmatpush1.msra.mxu0 %v415
        %458 = vmatprep.subr.mxu0 %v414
        %459 = vmatpush1.msra.mxu0 %v413
        %460 = vmatprep.subr.mxu0 %v412
        %461 = vmatpush1.msra.mxu0 %v411
        %462 = vmatprep.subr.mxu0 %v410
        %463 = vmatpush1.msra.mxu0 %v409
        %464 = vmatprep.subr.mxu0 %v408
        %465 = vmatpush1.msra.mxu0 %v407
        %466 = vmatprep.subr.mxu0 %v406
        %467 = vmatpush1.msra.mxu0 %v405
        %468 = vmatprep.subr.mxu0 %v404
        %469 = vmatpush1.msra.mxu0 %v403
        %470 = vmatprep.subr.mxu0 %v402
        %471 = vmatpush1.msra.mxu0 %v401
        %472 = vmatprep.subr.mxu0 %v400
        %473 = vmatpush1.msra.mxu0 %v399
        %474 = vmatprep.subr.mxu0 %v398
        %475 = vmatpush1.msra.mxu0 %v397
        %476 = vmatprep.subr.mxu0 %v396
        %477 = vmatpush1.msra.mxu0 %v395
        %478 = vmatprep.subr.mxu0 0.0
        %479 = vmatpush2.msra.mxu0 0.0
        %480 = vmatprep.subr.mxu0 0.0
        %481 = vmatpush2.msra.mxu0 0.0
        %482 = vmatprep.subr.mxu0 0.0
        %483 = vmatpush2.msra.mxu0 0.0
        %484 = vmatprep.subr.mxu0 0.0
        %485 = vmatpush2.msra.mxu0 0.0
        %486 = vmatprep.subr.mxu0 0.0
        %487 = vmatpush2.msra.mxu0 0.0
        %488 = vmatprep.subr.mxu0 0.0
        %489 = vmatpush2.msra.mxu0 0.0
        %490 = vmatprep.subr.mxu0 0.0
        %491 = vmatpush2.msra.mxu0 0.0
        %492 = vmatprep.subr.mxu0 0.0
        %493 = vmatpush2.msra.mxu0 0.0
        %494 = vmatprep.subr.mxu0 0.0
        %495 = vmatpush2.msra.mxu0 0.0
        %496 = vmatprep.subr.mxu0 0.0
        %497 = vmatpush2.msra.mxu0 0.0
        %498 = vmatprep.subr.mxu0 0.0
        %499 = vmatpush2.msra.mxu0 0.0
        %500 = vmatprep.subr.mxu0 0.0
        %501 = vmatpush2.msra.mxu0 0.0
        %502 = vmatprep.subr.mxu0 0.0
        %503 = vmatpush2.msra.mxu0 0.0
        %504 = vmatprep.subr.mxu0 0.0
        %505 = vmatpush2.msra.mxu0 0.0
        %506 = vmatprep.subr.mxu0 0.0
        %507 = vmatpush2.msra.mxu0 0.0
        %508 = vmatprep.subr.mxu0 0.0
        %509 = vmatpush2.msra.mxu0 0.0
        %510 = vmatprep.mubr.f32.mxu0 0.0
        %511 = vmatmul.mubr.f32.gmra.mxu0 %v394
        %v512 = vpop.f32.mrf.mxu0
        %v513 = vadd.f32 %v441, %v512
        %v514 = vpop.f32.mrf.mxu0
        %v515 = vadd.f32 %v445, %v514
        %516 = vdwg.mxu0
        %v517 = vmax.f32 %v513, 0.0
        %v518 = vmax.f32 %v515, 0.0
        %v519 = vld [vmem:[%s332] sm:$0xff]
        %v520 = vld [vmem:[%s332 + $0x8] sm:$0xff]
        %v521 = vld [vmem:[%s332 + $0x10] sm:$0xff]
        %v522 = vld [vmem:[%s332 + $0x18] sm:$0xff]
        %v523 = vld [vmem:[%s332 + $0x20] sm:$0xff]
        %v524 = vld [vmem:[%s332 + $0x28] sm:$0xff]
        %v525 = vld [vmem:[%s332 + $0x30] sm:$0xff]
        %v526 = vld [vmem:[%s332 + $0x38] sm:$0xff]
        %v527 = vld [vmem:[%s332 + $0x40] sm:$0xff]
        %v528 = vld [vmem:[%s332 + $0x48] sm:$0xff]
        %v529 = vld [vmem:[%s332 + $0x50] sm:$0xff]
        %v530 = vld [vmem:[%s332 + $0x58] sm:$0xff]
        %v531 = vld [vmem:[%s332 + $0x60] sm:$0xff]
        %v532 = vld [vmem:[%s332 + $0x68] sm:$0xff]
        %v533 = vld [vmem:[%s332 + $0x70] sm:$0xff]
        %v534 = vld [vmem:[%s332 + $0x78] sm:$0xff]
        %v535 = vld [vmem:[%s332 + $0x80] sm:$0xff]
        %v536 = vld [vmem:[%s332 + $0x88] sm:$0xff]
        %v537 = vld [vmem:[%s332 + $0x90] sm:$0xff]
        %v538 = vld [vmem:[%s332 + $0x98] sm:$0xff]
        %v539 = vld [vmem:[%s332 + $0xa0] sm:$0xff]
        %v540 = vld [vmem:[%s332 + $0xa8] sm:$0xff]
        %v541 = vld [vmem:[%s332 + $0xb0] sm:$0xff]
        %v542 = vld [vmem:[%s332 + $0xb8] sm:$0xff]
        %v543 = vld [vmem:[%s332 + $0xc0] sm:$0xff]
        %v544 = vld [vmem:[%s332 + $0xc8] sm:$0xff]
        %v545 = vld [vmem:[%s332 + $0xd0] sm:$0xff]
        %v546 = vld [vmem:[%s332 + $0xd8] sm:$0xff]
        %v547 = vld [vmem:[%s332 + $0xe0] sm:$0xff]
        %v548 = vld [vmem:[%s332 + $0xe8] sm:$0xff]
        %v549 = vld [vmem:[%s332 + $0xf0] sm:$0xff]
        %v550 = vld [vmem:[%s332 + $0xf8] sm:$0xff]
        %v551 = vlaneseq
        %v552 = vshrl.u32 %v551, 7
        %v553 = vsub.s32 0, %v552
        %v554 = vrot.slane %v393, %v553
        %555 = vmatprep.subr.mxu0 0.0
        %556 = vmatpush1.msra.mxu0 %v534
        %557 = vmatprep.subr.mxu0 0.0
        %558 = vmatpush1.msra.mxu0 %v533
        %559 = vmatprep.subr.mxu0 0.0
        %560 = vmatpush1.msra.mxu0 %v532
        %561 = vmatprep.subr.mxu0 0.0
        %562 = vmatpush1.msra.mxu0 %v531
        %563 = vmatprep.subr.mxu0 0.0
        %564 = vmatpush1.msra.mxu0 %v530
        %565 = vmatprep.subr.mxu0 0.0
        %566 = vmatpush1.msra.mxu0 %v529
        %567 = vmatprep.subr.mxu0 0.0
        %568 = vmatpush1.msra.mxu0 %v528
        %569 = vmatprep.subr.mxu0 0.0
        %570 = vmatpush1.msra.mxu0 %v527
        %571 = vmatprep.subr.mxu0 0.0
        %572 = vmatpush1.msra.mxu0 %v526
        %573 = vmatprep.subr.mxu0 0.0
        %574 = vmatpush1.msra.mxu0 %v525
        %575 = vmatprep.subr.mxu0 0.0
        %576 = vmatpush1.msra.mxu0 %v524
        %577 = vmatprep.subr.mxu0 0.0
        %578 = vmatpush1.msra.mxu0 %v523
        %579 = vmatprep.subr.mxu0 0.0
        %580 = vmatpush1.msra.mxu0 %v522
        %581 = vmatprep.subr.mxu0 0.0
        %582 = vmatpush1.msra.mxu0 %v521
        %583 = vmatprep.subr.mxu0 0.0
        %584 = vmatpush1.msra.mxu0 %v520
        %585 = vmatprep.subr.mxu0 0.0
        %586 = vmatpush1.msra.mxu0 %v519
        %587 = vmatprep.subr.mxu0 0.0
        %588 = vmatpush2.msra.mxu0 %v550
        %589 = vmatprep.subr.mxu0 0.0
        %590 = vmatpush2.msra.mxu0 %v549
        %591 = vmatprep.subr.mxu0 0.0
        %592 = vmatpush2.msra.mxu0 %v548
        %593 = vmatprep.subr.mxu0 0.0
        %594 = vmatpush2.msra.mxu0 %v547
        %595 = vmatprep.subr.mxu0 0.0
        %596 = vmatpush2.msra.mxu0 %v546
        %597 = vmatprep.subr.mxu0 0.0
        %598 = vmatpush2.msra.mxu0 %v545
        %599 = vmatprep.subr.mxu0 0.0
        %600 = vmatpush2.msra.mxu0 %v544
        %601 = vmatprep.subr.mxu0 0.0
        %602 = vmatpush2.msra.mxu0 %v543
        %603 = vmatprep.subr.mxu0 0.0
        %604 = vmatpush2.msra.mxu0 %v542
        %605 = vmatprep.subr.mxu0 0.0
        %606 = vmatpush2.msra.mxu0 %v541
        %607 = vmatprep.subr.mxu0 0.0
        %608 = vmatpush2.msra.mxu0 %v540
        %609 = vmatprep.subr.mxu0 0.0
        %610 = vmatpush2.msra.mxu0 %v539
        %611 = vmatprep.subr.mxu0 0.0
        %612 = vmatpush2.msra.mxu0 %v538
        %613 = vmatprep.subr.mxu0 0.0
        %614 = vmatpush2.msra.mxu0 %v537
        %615 = vmatprep.subr.mxu0 0.0
        %616 = vmatpush2.msra.mxu0 %v536
        %617 = vmatprep.subr.mxu0 0.0
        %618 = vmatpush2.msra.mxu0 %v535
        %619 = vmatprep.mubr.f32.mxu0 %v518
        %620 = vmatmul.mubr.f32.gmra.mxu0 %v517
        %v621 = vpop.f32.mrf.mxu0
        %v622 = vadd.f32 %v554, %v621
        %v623 = vpop.f32.mrf.mxu0
        %624 = vdwg.mxu0
        %v625 = vmax.f32 %v622, 0.0
        %v626 = vadd.f32 %v625, %v394
        %s627 = scalar_lea.vmem %s314, 256 [#allocation4]
        %v628 = vld [vmem:[%s627] sm:$0xff]
        %v629 = vld [vmem:[%s627 + $0x8] sm:$0xff]
        %v630 = vld [vmem:[%s627 + $0x10] sm:$0xff]
        %v631 = vld [vmem:[%s627 + $0x18] sm:$0xff]
        %v632 = vld [vmem:[%s627 + $0x20] sm:$0xff]
        %v633 = vld [vmem:[%s627 + $0x28] sm:$0xff]
        %v634 = vld [vmem:[%s627 + $0x30] sm:$0xff]
        %v635 = vld [vmem:[%s627 + $0x38] sm:$0xff]
        %v636 = vld [vmem:[%s627 + $0x40] sm:$0xff]
        %v637 = vld [vmem:[%s627 + $0x48] sm:$0xff]
        %v638 = vld [vmem:[%s627 + $0x50] sm:$0xff]
        %v639 = vld [vmem:[%s627 + $0x58] sm:$0xff]
        %v640 = vld [vmem:[%s627 + $0x60] sm:$0xff]
        %v641 = vld [vmem:[%s627 + $0x68] sm:$0xff]
        %v642 = vld [vmem:[%s627 + $0x70] sm:$0xff]
        %v643 = vld [vmem:[%s627 + $0x78] sm:$0xff]
        %v644 = vld [vmem:[%s627 + $0x80] sm:$0xff]
        %v645 = vld [vmem:[%s627 + $0x88] sm:$0xff]
        %v646 = vld [vmem:[%s627 + $0x90] sm:$0xff]
        %v647 = vld [vmem:[%s627 + $0x98] sm:$0xff]
        %v648 = vld [vmem:[%s627 + $0xa0] sm:$0xff]
        %v649 = vld [vmem:[%s627 + $0xa8] sm:$0xff]
        %v650 = vld [vmem:[%s627 + $0xb0] sm:$0xff]
        %v651 = vld [vmem:[%s627 + $0xb8] sm:$0xff]
        %v652 = vld [vmem:[%s627 + $0xc0] sm:$0xff]
        %v653 = vld [vmem:[%s627 + $0xc8] sm:$0xff]
        %v654 = vld [vmem:[%s627 + $0xd0] sm:$0xff]
        %v655 = vld [vmem:[%s627 + $0xd8] sm:$0xff]
        %v656 = vld [vmem:[%s627 + $0xe0] sm:$0xff]
        %v657 = vld [vmem:[%s627 + $0xe8] sm:$0xff]
        %v658 = vld [vmem:[%s627 + $0xf0] sm:$0xff]
        %v659 = vld [vmem:[%s627 + $0xf8] sm:$0xff]
        %v660 = vlaneseq
        %v661 = vshrl.u32 %v660, 7
        %v662 = vsub.s32 1, %v661
        %v663 = vrot.slane %v392, %v662
        %v664 = vlaneseq
        %v665 = vshrl.u32 %v664, 7
        %v666 = vsub.s32 3, %v665
        %v667 = vrot.slane %v392, %v666
        %v670 = vlaneseq
        %v671 = vshrl.u32 %v670, 7
        %v672 = vsub.s32 1, %v671
        %v673 = vrot.slane %v663, %v672
        %v674 = vlaneseq
        %v675 = vshrl.u32 %v674, 7
        %v676 = vsub.s32 1, %v675
        %v677 = vrot.slane %v667, %v676
        %678 = vmatprep.subr.mxu0 %v659
        %679 = vmatpush1.msra.mxu0 %v658
        %680 = vmatprep.subr.mxu0 %v657
        %681 = vmatpush1.msra.mxu0 %v656
        %682 = vmatprep.subr.mxu0 %v655
        %683 = vmatpush1.msra.mxu0 %v654
        %684 = vmatprep.subr.mxu0 %v653
        %685 = vmatpush1.msra.mxu0 %v652
        %686 = vmatprep.subr.mxu0 %v651
        %687 = vmatpush1.msra.mxu0 %v650
        %688 = vmatprep.subr.mxu0 %v649
        %689 = vmatpush1.msra.mxu0 %v648
        %690 = vmatprep.subr.mxu0 %v647
        %691 = vmatpush1.msra.mxu0 %v646
        %692 = vmatprep.subr.mxu0 %v645
        %693 = vmatpush1.msra.mxu0 %v644
        %694 = vmatprep.subr.mxu0 %v643
        %695 = vmatpush1.msra.mxu0 %v642
        %696 = vmatprep.subr.mxu0 %v641
        %697 = vmatpush1.msra.mxu0 %v640
        %698 = vmatprep.subr.mxu0 %v639
        %699 = vmatpush1.msra.mxu0 %v638
        %700 = vmatprep.subr.mxu0 %v637
        %701 = vmatpush1.msra.mxu0 %v636
        %702 = vmatprep.subr.mxu0 %v635
        %703 = vmatpush1.msra.mxu0 %v634
        %704 = vmatprep.subr.mxu0 %v633
        %705 = vmatpush1.msra.mxu0 %v632
        %706 = vmatprep.subr.mxu0 %v631
        %707 = vmatpush1.msra.mxu0 %v630
        %708 = vmatprep.subr.mxu0 %v629
        %709 = vmatpush1.msra.mxu0 %v628
        %710 = vmatprep.subr.mxu0 0.0
        %711 = vmatpush2.msra.mxu0 0.0
        %712 = vmatprep.subr.mxu0 0.0
        %713 = vmatpush2.msra.mxu0 0.0
        %714 = vmatprep.subr.mxu0 0.0
        %715 = vmatpush2.msra.mxu0 0.0
        %716 = vmatprep.subr.mxu0 0.0
        %717 = vmatpush2.msra.mxu0 0.0
        %718 = vmatprep.subr.mxu0 0.0
        %719 = vmatpush2.msra.mxu0 0.0
        %720 = vmatprep.subr.mxu0 0.0
        %721 = vmatpush2.msra.mxu0 0.0
        %722 = vmatprep.subr.mxu0 0.0
        %723 = vmatpush2.msra.mxu0 0.0
        %724 = vmatprep.subr.mxu0 0.0
        %725 = vmatpush2.msra.mxu0 0.0
        %726 = vmatprep.subr.mxu0 0.0
        %727 = vmatpush2.msra.mxu0 0.0
        %728 = vmatprep.subr.mxu0 0.0
        %729 = vmatpush2.msra.mxu0 0.0
        %730 = vmatprep.subr.mxu0 0.0
        %731 = vmatpush2.msra.mxu0 0.0
        %732 = vmatprep.subr.mxu0 0.0
        %733 = vmatpush2.msra.mxu0 0.0
        %734 = vmatprep.subr.mxu0 0.0
        %735 = vmatpush2.msra.mxu0 0.0
        %736 = vmatprep.subr.mxu0 0.0
        %737 = vmatpush2.msra.mxu0 0.0
        %738 = vmatprep.subr.mxu0 0.0
        %739 = vmatpush2.msra.mxu0 0.0
        %740 = vmatprep.subr.mxu0 0.0
        %741 = vmatpush2.msra.mxu0 0.0
        %742 = vmatprep.mubr.f32.mxu0 0.0
        %743 = vmatmul.mubr.f32.gmra.mxu0 %v626
        %v744 = vpop.f32.mrf.mxu0
        %v745 = vadd.f32 %v673, %v744
        %v746 = vpop.f32.mrf.mxu0
        %v747 = vadd.f32 %v677, %v746
        %748 = vdwg.mxu0
        %v749 = vmax.f32 %v745, 0.0
        %v750 = vmax.f32 %v747, 0.0
        %s751 = scalar_lea.vmem %s332, 256 [#allocation7]
        %v752 = vld [vmem:[%s751] sm:$0xff]
        %v753 = vld [vmem:[%s751 + $0x8] sm:$0xff]
        %v754 = vld [vmem:[%s751 + $0x10] sm:$0xff]
        %v755 = vld [vmem:[%s751 + $0x18] sm:$0xff]
        %v756 = vld [vmem:[%s751 + $0x20] sm:$0xff]
        %v757 = vld [vmem:[%s751 + $0x28] sm:$0xff]
        %v758 = vld [vmem:[%s751 + $0x30] sm:$0xff]
        %v759 = vld [vmem:[%s751 + $0x38] sm:$0xff]
        %v760 = vld [vmem:[%s751 + $0x40] sm:$0xff]
        %v761 = vld [vmem:[%s751 + $0x48] sm:$0xff]
        %v762 = vld [vmem:[%s751 + $0x50] sm:$0xff]
        %v763 = vld [vmem:[%s751 + $0x58] sm:$0xff]
        %v764 = vld [vmem:[%s751 + $0x60] sm:$0xff]
        %v765 = vld [vmem:[%s751 + $0x68] sm:$0xff]
        %v766 = vld [vmem:[%s751 + $0x70] sm:$0xff]
        %v767 = vld [vmem:[%s751 + $0x78] sm:$0xff]
        %v768 = vld [vmem:[%s751 + $0x80] sm:$0xff]
        %v769 = vld [vmem:[%s751 + $0x88] sm:$0xff]
        %v770 = vld [vmem:[%s751 + $0x90] sm:$0xff]
        %v771 = vld [vmem:[%s751 + $0x98] sm:$0xff]
        %v772 = vld [vmem:[%s751 + $0xa0] sm:$0xff]
        %v773 = vld [vmem:[%s751 + $0xa8] sm:$0xff]
        %v774 = vld [vmem:[%s751 + $0xb0] sm:$0xff]
        %v775 = vld [vmem:[%s751 + $0xb8] sm:$0xff]
        %v776 = vld [vmem:[%s751 + $0xc0] sm:$0xff]
        %v777 = vld [vmem:[%s751 + $0xc8] sm:$0xff]
        %v778 = vld [vmem:[%s751 + $0xd0] sm:$0xff]
        %v779 = vld [vmem:[%s751 + $0xd8] sm:$0xff]
        %v780 = vld [vmem:[%s751 + $0xe0] sm:$0xff]
        %v781 = vld [vmem:[%s751 + $0xe8] sm:$0xff]
        %v782 = vld [vmem:[%s751 + $0xf0] sm:$0xff]
        %v783 = vld [vmem:[%s751 + $0xf8] sm:$0xff]
        %v784 = vlaneseq
        %v785 = vshrl.u32 %v784, 7
        %v786 = vsub.s32 1, %v785
        %v787 = vrot.slane %v393, %v786
        %788 = vmatprep.subr.mxu0 0.0
        %789 = vmatpush1.msra.mxu0 %v767
        %790 = vmatprep.subr.mxu0 0.0
        %791 = vmatpush1.msra.mxu0 %v766
        %792 = vmatprep.subr.mxu0 0.0
        %793 = vmatpush1.msra.mxu0 %v765
        %794 = vmatprep.subr.mxu0 0.0
        %795 = vmatpush1.msra.mxu0 %v764
        %796 = vmatprep.subr.mxu0 0.0
        %797 = vmatpush1.msra.mxu0 %v763
        %798 = vmatprep.subr.mxu0 0.0
        %799 = vmatpush1.msra.mxu0 %v762
        %800 = vmatprep.subr.mxu0 0.0
        %801 = vmatpush1.msra.mxu0 %v761
        %802 = vmatprep.subr.mxu0 0.0
        %803 = vmatpush1.msra.mxu0 %v760
        %804 = vmatprep.subr.mxu0 0.0
        %805 = vmatpush1.msra.mxu0 %v759
        %806 = vmatprep.subr.mxu0 0.0
        %807 = vmatpush1.msra.mxu0 %v758
        %808 = vmatprep.subr.mxu0 0.0
        %809 = vmatpush1.msra.mxu0 %v757
        %810 = vmatprep.subr.mxu0 0.0
        %811 = vmatpush1.msra.mxu0 %v756
        %812 = vmatprep.subr.mxu0 0.0
        %813 = vmatpush1.msra.mxu0 %v755
        %814 = vmatprep.subr.mxu0 0.0
        %815 = vmatpush1.msra.mxu0 %v754
        %816 = vmatprep.subr.mxu0 0.0
        %817 = vmatpush1.msra.mxu0 %v753
        %818 = vmatprep.subr.mxu0 0.0
        %819 = vmatpush1.msra.mxu0 %v752
        %820 = vmatprep.subr.mxu0 0.0
        %821 = vmatpush2.msra.mxu0 %v783
        %822 = vmatprep.subr.mxu0 0.0
        %823 = vmatpush2.msra.mxu0 %v782
        %824 = vmatprep.subr.mxu0 0.0
        %825 = vmatpush2.msra.mxu0 %v781
        %826 = vmatprep.subr.mxu0 0.0
        %827 = vmatpush2.msra.mxu0 %v780
        %828 = vmatprep.subr.mxu0 0.0
        %829 = vmatpush2.msra.mxu0 %v779
        %830 = vmatprep.subr.mxu0 0.0
        %831 = vmatpush2.msra.mxu0 %v778
        %832 = vmatprep.subr.mxu0 0.0
        %833 = vmatpush2.msra.mxu0 %v777
        %834 = vmatprep.subr.mxu0 0.0
        %835 = vmatpush2.msra.mxu0 %v776
        %836 = vmatprep.subr.mxu0 0.0
        %837 = vmatpush2.msra.mxu0 %v775
        %838 = vmatprep.subr.mxu0 0.0
        %839 = vmatpush2.msra.mxu0 %v774
        %840 = vmatprep.subr.mxu0 0.0
        %841 = vmatpush2.msra.mxu0 %v773
        %842 = vmatprep.subr.mxu0 0.0
        %843 = vmatpush2.msra.mxu0 %v772
        %844 = vmatprep.subr.mxu0 0.0
        %845 = vmatpush2.msra.mxu0 %v771
        %846 = vmatprep.subr.mxu0 0.0
        %847 = vmatpush2.msra.mxu0 %v770
        %848 = vmatprep.subr.mxu0 0.0
        %849 = vmatpush2.msra.mxu0 %v769
        %850 = vmatprep.subr.mxu0 0.0
        %851 = vmatpush2.msra.mxu0 %v768
        %852 = vmatprep.mubr.f32.mxu0 %v750
        %853 = vmatmul.mubr.f32.gmra.mxu0 %v749
        %v854 = vpop.f32.mrf.mxu0
        %v855 = vadd.f32 %v787, %v854
        %v856 = vpop.f32.mrf.mxu0
        %857 = vdwg.mxu0
        %v858 = vmax.f32 %v855, 0.0
        %v859 = vadd.f32 %v858, %v626
        %860 = vst [vmem:[%s391] sm:$0xff] %v859
        %p861 = scmp.lt.s32.totalorder %s27, 1
        %s862 = scalar_select %p861, %s27, 1
        %p863 = scmp.lt.s32.totalorder %s28, 0
        %s864 = scalar_select %p863, %s28, 0
        %s865 = sadd.s32 %s864, %s862
        %s866 = smul.addr %s865, 8
        %s867 = scalar_lea.vmem %s5, %s866
        // Predicated region
        $region61: #{extract_fc_forward.1} parent=39 // pred_check
          %p868 = pneg %p185
        $region62: #{extract_fc_forward.1} parent=39 // pred_check_branch
          %870 = sbr.rel (%p868) target = $region64
        $region63: #{extract_fc_forward.1} parent=39 // pred_region
          _
        $region64: #{extract_fc_forward.1} parent=39 // pred_fallthru
          _
      $region40: #{extract_fc_forward.1} parent=5 // pred_fallthru
        _
      %p871 = scmp.le.s32.totalorder 2, %s18
      // Predicated region
      $region65: #{extract_fc_forward.1} parent=5 // pred_check
        %p872 = pneg %p871
      $region66: #{extract_fc_forward.1} parent=5 // pred_check_branch
        %874 = sbr.rel (%p872) target = $region68
      $region67: #{extract_fc_forward.1} parent=5 // pred_region
        %s875 = ssub.s32 %s18, 2
        // Predicated region
        $region69: #{extract_fc_forward.1} parent=67 // pred_check
          %p876 = pneg %p191
        $region70: #{extract_fc_forward.1} parent=67 // pred_check_branch
          %878 = sbr.rel (%p876) target = $region72
        $region71: #{extract_fc_forward.1} parent=67 // pred_region
          %p879 = scmp.lt.s32.totalorder %s29, 1
          %s880 = scalar_select %p879, %s29, 1
          %p881 = scmp.lt.s32.totalorder %s30, 0
          %s882 = scalar_select %p881, %s30, 0
          %s883 = sadd.s32 %s882, %s880
          %s884 = smul.addr %s883, 8
          %s885 = scalar_lea.vmem %s5, %s884
        $region72: #{extract_fc_forward.1} parent=67 // pred_fallthru
          _
      $region68: #{extract_fc_forward.1} parent=5 // pred_fallthru
        _
    $region6: #{extract_fc_forward.1} parent=1 // loop_footer
      %s22 = sadd.s32 1, %s18
    $region7: #{extract_fc_forward.1} parent=1 // loop_footer_branch
      %17 = sbr.rel target = $region3
    $region8: #{extract_fc_forward.1} parent=1 // loop_exit
      _
    %886 = vsyncpa [#allocation3], 1
    %s887 = scalar_lea.sflag [#allocation3], 1
    %888 = vsyncpa %s887, 1
    %889 = vsyncpa [#allocation5], 1
    %s890 = scalar_lea.sflag [#allocation5], 1
    %891 = vsyncpa %s890, 1
    %892 = vsyncpa [#allocation8], 1
    %s893 = scalar_lea.sflag [#allocation8], 1
    %894 = vsyncpa %s893, 1

</llo_original>
